<compile_context>
chip_gen: v6e
topology: v6e:2x2x1
jax: 0.10.0
libtpu: 0.0.40
codegen_flags: <defaults>
</compile_context>

<pallas_src>
import jax
import jax.numpy as jnp
from jax.experimental import pallas as pl
from jax.experimental.pallas import tpu as pltpu


def _fusion_kernel(x8_ref, x16_ref, w2_ref, b_ref, out_ref):
    # x8_ref : (NB, H, W2, 2*C8)   stride-8 features, W-pairs folded into channels
    # x16_ref: (NB, H2, W2, C16)   stride-16 features (pass-through)
    # w2_ref : (2*C8, Cout)        1x1-conv weight stacked twice along K, pre-scaled by 0.25
    # b_ref  : (1, Cout)           1x1-conv bias
    # out_ref: (NB, H2, W2, Cout + C16)
    x8 = x8_ref[...]
    nb, h, w2, c2 = x8.shape
    h2 = h // 2

    # H-pair half of the 2x2 average pool: the pair axis is an outer axis, so
    # this is a plain VPU add of whole (W2, 2*C8) slabs (no sublane shuffles).
    xp = x8.reshape(nb * h2, 2, w2, c2)
    xsum = xp[:, 0] + xp[:, 1]                               # (NB*H2, W2, 2*C8)

    # W-pair half of the pool + 1x1 conv + 0.25 scale: one MXU matmul, K = 2*C8.
    flat = xsum.reshape(nb * h2 * w2, c2)
    conv = jnp.dot(flat, w2_ref[...], preferred_element_type=jnp.float32)
    conv = (conv + b_ref[...]).reshape(nb, h2, w2, -1).astype(out_ref.dtype)

    # Channel concat (Cout + C16 = 128) -> a single lane-dense 128-wide store.
    out_ref[...] = jnp.concatenate(
        [conv, x16_ref[...].astype(out_ref.dtype)], axis=-1)


def feature_fusion_nhwc(x8_nhwc, x16_nhwc, weight, bias, *,
                        vmem_budget_bytes=8 << 20):
    """Zero-transpose (channels-last) entry point.

    x8_nhwc : (N, H, W, C8) NHWC stride-8 features.
    x16_nhwc: (N, H/2, W/2, C16) NHWC stride-16 features.
    weight  : (Cout, C8, 1, 1) PyTorch conv weight layout.
    bias    : (Cout,).
    Returns (N, H/2, W/2, Cout + C16) NHWC.
    """
    N, H, W, C8 = x8_nhwc.shape
    _, H2, W2, C16 = x16_nhwc.shape
    Cout = weight.shape[0]
    assert H % 2 == 0 and W % 2 == 0 and H2 == H // 2 and W2 == W // 2

    dtype = x8_nhwc.dtype
    itemsize = jnp.dtype(dtype).itemsize

    # Fold the W-pair pool reduction into the matmul K axis:
    #   (N, H, W, C8) -> (N, H, W/2, 2*C8)   (contiguous reshape, free in HBM)
    x8r = x8_nhwc.reshape(N, H, W2, 2 * C8)
    # Conv weight (Cout, C8, 1, 1) -> (C8, Cout), stacked twice along K, with
    # the 0.25 average-pool scale folded in (removes a full-tile VPU multiply).
    w = jnp.transpose(weight.reshape(Cout, C8), (1, 0))
    w2 = (jnp.concatenate([w, w], axis=0) * 0.25).astype(dtype)
    b2d = bias.reshape(1, Cout).astype(jnp.float32)

    # --- batch elements per grid step (amortize per-step overhead, fill MXU M) ---
    per_elem_bytes = (H * W * C8 + H2 * W2 * C16 + H2 * W2 * (Cout + C16)) * itemsize
    nb_cap = max(1, vmem_budget_bytes // (2 * per_elem_bytes))   # x2: double-buffered
    nb_cap = int(min(nb_cap, N))
    if N >= 2:
        nb_cap = min(nb_cap, pl.cdiv(N, 2))   # keep >= 2 grid steps (v7x has 2 TCs)
    nb = 1
    for d in range(nb_cap, 0, -1):            # largest divisor of N -> no ragged block
        if N % d == 0:
            nb = d
            break

    # VMEM sizing: double-buffered blocks + (once-fetched) weight/bias.
    vmem_need = 2 * nb * per_elem_bytes + (w2.size + b2d.size) * 4
    params = {"dimension_semantics": ("parallel",)}
    if vmem_need > (12 << 20):   # above v5e's 16 MiB default scoped-VMEM comfort zone
        params["vmem_limit_bytes"] = int(min(2 * vmem_need, 32 << 20))

    return pl.pallas_call(
        _fusion_kernel,
        out_shape=jax.ShapeDtypeStruct((N, H2, W2, Cout + C16), dtype),
        grid_spec=pl.GridSpec(
            grid=(N // nb,),
            in_specs=[
                pl.BlockSpec((nb, H, W2, 2 * C8), lambda n: (n, 0, 0, 0)),
                pl.BlockSpec((nb, H2, W2, C16), lambda n: (n, 0, 0, 0)),
                pl.BlockSpec((2 * C8, Cout), lambda n: (0, 0)),   # fetched once
                pl.BlockSpec((1, Cout), lambda n: (0, 0)),        # fetched once
            ],
            out_specs=pl.BlockSpec((nb, H2, W2, Cout + C16),
                                   lambda n: (n, 0, 0, 0)),
        ),
        compiler_params=pltpu.CompilerParams(**params),
    )(x8r, x16_nhwc, w2, b2d)


def feature_fusion(feature_stride_8, feature_stride_16, weight, bias):
    """NCHW glue wrapper matching the PyTorch module signature.

    Prefer `feature_fusion_nhwc` inside a channels-last graph: the transposes
    below are separate HBM round trips that dominate this bandwidth-bound op.
    """
    N, C8, H, W = feature_stride_8.shape
    _, C16, H2, W2 = feature_stride_16.shape
    assert H2 == H // 2 and W2 == W // 2
    x8 = jnp.transpose(feature_stride_8, (0, 2, 3, 1))      # (N, H, W, C8)
    x16 = jnp.transpose(feature_stride_16, (0, 2, 3, 1))    # (N, H2, W2, C16)
    out_nhwc = feature_fusion_nhwc(x8, x16, weight, bias)
    return jnp.transpose(out_nhwc, (0, 3, 1, 2))            # back to NCHW


def _reference(feature_stride_8, feature_stride_16, weight, bias):
    # Pure-JAX reference of the PyTorch forward (NCHW).
    N, C8, H, W = feature_stride_8.shape
    pooled = feature_stride_8.reshape(N, C8, H // 2, 2, W // 2, 2).mean(axis=(3, 5))
    w = weight.reshape(weight.shape[0], C8)                  # (Cout, C8)
    conv = jnp.einsum('nchw,oc->nohw', pooled, w) + bias[None, :, None, None]
    return jnp.concatenate([conv, feature_stride_16], axis=1)


if __name__ == "__main__":
    key = jax.random.PRNGKey(0)
    k1, k2, k3, k4 = jax.random.split(key, 4)

    # Small shapes consistent with the module: stride-8 feature has 2x the
    # spatial resolution of the stride-16 feature.
    N, C8, C16, Cout = 2, 256, 64, 64
    H = W = 16

    feature_stride_8 = jax.random.normal(k1, (N, C8, H, W), dtype=jnp.float32)
    feature_stride_16 = jax.random.normal(k2, (N, C16, H // 2, W // 2),
                                          dtype=jnp.float32)

    # Deterministic 1x1-conv parameters (PyTorch-style shapes, synthetic init).
    fan_in = C8
    bound = 1.0 / (fan_in ** 0.5)
    weight = jax.random.uniform(k3, (Cout, C8, 1, 1), jnp.float32, -bound, bound)
    bias = jax.random.uniform(k4, (Cout,), jnp.float32, -bound, bound)

    out = feature_fusion(feature_stride_8, feature_stride_16, weight, bias)
    out = jax.block_until_ready(out)

    ref = _reference(feature_stride_8, feature_stride_16, weight, bias)
    assert out.shape == (N, Cout + C16, H // 2, W // 2), out.shape
    assert jnp.allclose(out, ref, atol=1e-4, rtol=1e-4), "mismatch vs reference"

    print("KERNEL_OK")
</pallas_src>

<mosaic_0001>
module attributes {stable_mosaic.version = 11 : i64} {
  func.func @_fusion_kernel(%arg0: i32, %arg1: memref<1x16x8x512xf32, #tpu.memory_space<vmem>>, %arg2: memref<1x8x8x64xf32, #tpu.memory_space<vmem>>, %arg3: memref<512x64xf32, #tpu.memory_space<vmem>>, %arg4: memref<1x64xf32, #tpu.memory_space<vmem>>, %arg5: memref<1x8x8x128xf32, #tpu.memory_space<vmem>>) attributes {dimension_semantics = [#tpu.dimension_semantics<parallel>], iteration_bounds = array<i64: 2>, scalar_prefetch = 0 : i64, scratch_operands = 0 : i64, tpu.core_type = #tpu.core_type<tc>, window_params = [{transform_indices = @transform_0, window_bounds = array<i64: 1, 16, 8, 512>}, {transform_indices = @transform_1, window_bounds = array<i64: 1, 8, 8, 64>}, {pipeline_mode = #tpu.pipeline_mode<synchronous>, transform_indices = @transform_2, window_bounds = array<i64: 512, 64>}, {pipeline_mode = #tpu.pipeline_mode<synchronous>, transform_indices = @transform_3, window_bounds = array<i64: 1, 64>}, {transform_indices = @transform_4, window_bounds = array<i64: 1, 8, 8, 128>}]} {
    %c0 = arith.constant 0 : index
    %c0_0 = arith.constant 0 : index
    %c0_1 = arith.constant 0 : index
    %c0_2 = arith.constant 0 : index
    %0 = vector.load %arg1[%c0, %c0_0, %c0_1, %c0_2] : memref<1x16x8x512xf32, #tpu.memory_space<vmem>>, vector<1x16x8x512xf32>
    %1 = vector.shape_cast %0 : vector<1x16x8x512xf32> to vector<8x2x8x512xf32>
    %2 = vector.extract_strided_slice %1 {offsets = [0, 0, 0, 0], sizes = [8, 1, 8, 512], strides = [1, 1, 1, 1]} : vector<8x2x8x512xf32> to vector<8x1x8x512xf32>
    %3 = vector.shape_cast %2 : vector<8x1x8x512xf32> to vector<8x8x512xf32>
    %4 = vector.extract_strided_slice %1 {offsets = [0, 1, 0, 0], sizes = [8, 1, 8, 512], strides = [1, 1, 1, 1]} : vector<8x2x8x512xf32> to vector<8x1x8x512xf32>
    %5 = vector.shape_cast %4 : vector<8x1x8x512xf32> to vector<8x8x512xf32>
    %6 = arith.addf %3, %5 : vector<8x8x512xf32>
    %7 = vector.shape_cast %6 : vector<8x8x512xf32> to vector<64x512xf32>
    %c0_3 = arith.constant 0 : index
    %c0_4 = arith.constant 0 : index
    %8 = vector.load %arg3[%c0_3, %c0_4] : memref<512x64xf32, #tpu.memory_space<vmem>>, vector<512x64xf32>
    %cst = arith.constant dense<0.000000e+00> : vector<64x64xf32>
    %9 = tpu.matmul %7, %8, %cst {dimension_numbers = #tpu.dot_dimension_numbers<[1], [0], [0], [1], [0, 0, 1, 1], [], []>} : vector<64x512xf32>, vector<512x64xf32>, vector<64x64xf32> -> vector<64x64xf32>
    %c0_5 = arith.constant 0 : index
    %c0_6 = arith.constant 0 : index
    %10 = vector.load %arg4[%c0_5, %c0_6] : memref<1x64xf32, #tpu.memory_space<vmem>>, vector<1x64xf32>
    %11 = vector.broadcast %10 : vector<1x64xf32> to vector<64x64xf32>
    %12 = arith.addf %9, %11 : vector<64x64xf32>
    %13 = vector.shape_cast %12 : vector<64x64xf32> to vector<1x8x8x64xf32>
    %c0_7 = arith.constant 0 : index
    %c0_8 = arith.constant 0 : index
    %c0_9 = arith.constant 0 : index
    %c0_10 = arith.constant 0 : index
    %14 = vector.load %arg2[%c0_7, %c0_8, %c0_9, %c0_10] : memref<1x8x8x64xf32, #tpu.memory_space<vmem>>, vector<1x8x8x64xf32>
    %15 = tpu.concatenate %13, %14 in 3 : vector<1x8x8x64xf32>, vector<1x8x8x64xf32> -> vector<1x8x8x128xf32>
    %c0_11 = arith.constant 0 : index
    %c0_12 = arith.constant 0 : index
    %c0_13 = arith.constant 0 : index
    %c0_14 = arith.constant 0 : index
    %16 = vector.load %arg5[%c0_11, %c0_12, %c0_13, %c0_14] : memref<1x8x8x128xf32, #tpu.memory_space<vmem>>, vector<1x8x8x128xf32>
    tpu.vector_store %arg5[%c0_11, %c0_12, %c0_13, %c0_14], %15 {strides = array<i32>} : memref<1x8x8x128xf32, #tpu.memory_space<vmem>>, vector<1x8x8x128xf32>,
    return
  }
  func.func @transform_0(%arg0: i32) -> (i32, i32, i32, i32) {
    %c0_i32 = arith.constant 0 : i32
    %c0_i32_0 = arith.constant 0 : i32
    %c0_i32_1 = arith.constant 0 : i32
    %c0_i32_2 = arith.constant 0 : i32
    return %arg0, %c0_i32, %c0_i32_0, %c0_i32_1 : i32, i32, i32, i32
  }
  func.func @transform_1(%arg0: i32) -> (i32, i32, i32, i32) {
    %c0_i32 = arith.constant 0 : i32
    %c0_i32_0 = arith.constant 0 : i32
    %c0_i32_1 = arith.constant 0 : i32
    %c0_i32_2 = arith.constant 0 : i32
    return %arg0, %c0_i32, %c0_i32_0, %c0_i32_1 : i32, i32, i32, i32
  }
  func.func @transform_2(%arg0: i32) -> (i32, i32) {
    %c0_i32 = arith.constant 0 : i32
    %c0_i32_0 = arith.constant 0 : i32
    %c0_i32_1 = arith.constant 0 : i32
    return %c0_i32, %c0_i32_0 : i32, i32
  }
  func.func @transform_3(%arg0: i32) -> (i32, i32) {
    %c0_i32 = arith.constant 0 : i32
    %c0_i32_0 = arith.constant 0 : i32
    %c0_i32_1 = arith.constant 0 : i32
    return %c0_i32, %c0_i32_0 : i32, i32
  }
  func.func @transform_4(%arg0: i32) -> (i32, i32, i32, i32) {
    %c0_i32 = arith.constant 0 : i32
    %c0_i32_0 = arith.constant 0 : i32
    %c0_i32_1 = arith.constant 0 : i32
    %c0_i32_2 = arith.constant 0 : i32
    return %arg0, %c0_i32, %c0_i32_0, %c0_i32_1 : i32, i32, i32, i32
  }
}

</mosaic_0001>

<llo_original>
// kernel: tpu_custom_call.1
$region0: #{tpu_custom_call.1}
  #allocation0 [shape = 'u32[]', space=smem, size = 0x4, offset = 0x4, fixed_abs, tag = 'smem constant byte address 0x4 - core index']
  #allocation1 [shape = 'u32[144,128]{1,0:T(1,128)}', space=vmem, size = 0x12000, scoped, tag = 'internal scratch']
  %s0 = inlined_call_operand.hbm [shape: f32[2,16,8,512], index: 0, kind: input, shape index: {}]
  %s1 = inlined_call_operand.vmem [shape: f32[2,8,8,64], index: 1, kind: input, shape index: {}]
  %s2 = inlined_call_operand.vmem [shape: f32[512,64], index: 2, kind: input, shape index: {}]
  %s3 = inlined_call_operand.vmem [shape: f32[1,64], index: 3, kind: input, shape index: {}]
  %s4 = inlined_call_operand.hbm [shape: f32[2,8,8,128], index: 4, kind: output, shape index: {}]
  %s5 = sld [smem:[#allocation0]]
  $region53: #{tpu_custom_call.1} parent=0
    _
  %s7 = ssub.s32 1, %s5
  %s8 = scalar_select 0, %s7, %s5
  $region1: #{tpu_custom_call.1} parent=0
    #allocation2 [shape = 'u8[524288]{0}', space=vmem, size = 0x80000, scoped, tag = 'input window, operand 0']
    #allocation3 [shape = 's32[2]{0}', space=sflag, size = 0x8, scoped, tag = 'scoped memory for tpu_custom_call.1']
    #allocation4 [shape = 's32[2]{0}', space=sflag, size = 0x8, scoped, tag = 'scoped memory for tpu_custom_call.1']
    #allocation5 [shape = 'u8[65536]{0}', space=vmem, size = 0x10000, scoped, tag = 'output window, operand 0']
    %9 = vsyncpa [#allocation3], 0
    %s10 = scalar_lea.sflag [#allocation3], 1
    %11 = vsyncpa %s10, 0
    %12 = vsyncpa [#allocation4], 0
    %s13 = scalar_lea.sflag [#allocation4], 1
    %14 = vsyncpa %s13, 0
    loop: start=0, step=1, limit=4
    $region2: #{tpu_custom_call.1} parent=1 // loop_pre_header
      _
    $region3: #{tpu_custom_call.1} parent=1 // loop_header
      %s16 = sphi 0, %s20
      %p17 = scmp.ge.s32.totalorder %s16, 4
      %s26 = sphi 0, %s28
      %s29 = sphi 0, %s26
      %s30 = sphi 0, %s29
      %s46 = sphi 0, %s30
      %s52 = sphi 0, %s54
      %s55 = sphi 0, %s52
      %s56 = sphi 0, %s55
      %s72 = sphi 0, %s56
      %s76 = sphi 0, %s76
      %s78 = sphi 0, %s76
      %s79 = sphi 0, %s78
      %s93 = sphi 0, %s79
      %s97 = sphi 0, %s97
      %s99 = sphi 0, %s97
      %s100 = sphi 0, %s99
      %s114 = sphi 0, %s100
      %s120 = sphi 0, %s122
      %s123 = sphi 0, %s120
      %s124 = sphi 0, %s123
      %s140 = sphi 0, %s124
    $region4: #{tpu_custom_call.1} parent=1 // loop_header_branch
      %19 = sbr.rel (%p17) target = $region8
    $region5: #{tpu_custom_call.1} parent=1 // loop_body
      %s21 = ssub.s32 %s16, 1
      %s22 = ssub.s32 %s16, 2
      %s23 = sadd.s32 %s16, 1
      %s24 = ssub.s32 %s16, %s23
      %p25 = scmp.eq.s32.totalorder %s24, 0
      %s27 = sadd.s32 %s26, 1
      %s28 = scalar_select %p25, %s26, %s27
      %p31 = pneg %p25
      %p32 = scmp.eq.s32.totalorder %s16, 1
      %p33 = por %p31, %p32
      %p34 = scmp.ne.s32.totalorder %s26, %s29
      %p35 = scmp.eq.s32.totalorder %s16, 0
      %p36 = por %p34, %p35
      %p37 = scmp.ne.s32.totalorder %s26, %s29
      %p38 = scmp.eq.s32.totalorder %s21, 1
      %p39 = por %p37, %p38
      %p40 = scmp.ne.s32.totalorder %s29, %s30
      %p41 = scmp.eq.s32.totalorder %s21, 0
      %p42 = por %p40, %p41
      %p43 = scmp.ne.s32.totalorder %s29, %s30
      %p44 = scmp.eq.s32.totalorder %s22, 1
      %p45 = por %p43, %p44
      %p47 = scmp.ne.s32.totalorder %s30, %s46
      %p48 = scmp.eq.s32.totalorder %s22, 0
      %p49 = por %p47, %p48
      %s50 = ssub.s32 %s16, %s23
      %p51 = scmp.eq.s32.totalorder %s50, 0
      %s53 = sadd.s32 %s52, 1
      %s54 = scalar_select %p51, %s52, %s53
      %p57 = pneg %p51
      %p58 = scmp.eq.s32.totalorder %s16, 1
      %p59 = por %p57, %p58
      %p60 = scmp.ne.s32.totalorder %s52, %s55
      %p61 = scmp.eq.s32.totalorder %s16, 0
      %p62 = por %p60, %p61
      %p63 = scmp.ne.s32.totalorder %s52, %s55
      %p64 = scmp.eq.s32.totalorder %s21, 1
      %p65 = por %p63, %p64
      %p66 = scmp.ne.s32.totalorder %s55, %s56
      %p67 = scmp.eq.s32.totalorder %s21, 0
      %p68 = por %p66, %p67
      %p69 = scmp.ne.s32.totalorder %s55, %s56
      %p70 = scmp.eq.s32.totalorder %s22, 1
      %p71 = por %p69, %p70
      %p73 = scmp.ne.s32.totalorder %s56, %s72
      %p74 = scmp.eq.s32.totalorder %s22, 0
      %p75 = por %p73, %p74
      %s77 = sadd.s32 %s76, 1
      %p80 = scmp.eq.s32.totalorder %s16, 1
      %p81 = scmp.ne.s32.totalorder %s76, %s78
      %p82 = scmp.eq.s32.totalorder %s16, 0
      %p83 = por %p81, %p82
      %p84 = scmp.ne.s32.totalorder %s76, %s78
      %p85 = scmp.eq.s32.totalorder %s21, 1
      %p86 = por %p84, %p85
      %p87 = scmp.ne.s32.totalorder %s78, %s79
      %p88 = scmp.eq.s32.totalorder %s21, 0
      %p89 = por %p87, %p88
      %p90 = scmp.ne.s32.totalorder %s78, %s79
      %p91 = scmp.eq.s32.totalorder %s22, 1
      %p92 = por %p90, %p91
      %p94 = scmp.ne.s32.totalorder %s79, %s93
      %p95 = scmp.eq.s32.totalorder %s22, 0
      %p96 = por %p94, %p95
      %s98 = sadd.s32 %s97, 1
      %p101 = scmp.eq.s32.totalorder %s16, 1
      %p102 = scmp.ne.s32.totalorder %s97, %s99
      %p103 = scmp.eq.s32.totalorder %s16, 0
      %p104 = por %p102, %p103
      %p105 = scmp.ne.s32.totalorder %s97, %s99
      %p106 = scmp.eq.s32.totalorder %s21, 1
      %p107 = por %p105, %p106
      %p108 = scmp.ne.s32.totalorder %s99, %s100
      %p109 = scmp.eq.s32.totalorder %s21, 0
      %p110 = por %p108, %p109
      %p111 = scmp.ne.s32.totalorder %s99, %s100
      %p112 = scmp.eq.s32.totalorder %s22, 1
      %p113 = por %p111, %p112
      %p115 = scmp.ne.s32.totalorder %s100, %s114
      %p116 = scmp.eq.s32.totalorder %s22, 0
      %p117 = por %p115, %p116
      %s118 = ssub.s32 %s16, %s23
      %p119 = scmp.eq.s32.totalorder %s118, 0
      %s121 = sadd.s32 %s120, 1
      %s122 = scalar_select %p119, %s120, %s121
      %p125 = pneg %p119
      %p126 = scmp.eq.s32.totalorder %s16, 1
      %p127 = por %p125, %p126
      %p128 = scmp.ne.s32.totalorder %s120, %s123
      %p129 = scmp.eq.s32.totalorder %s16, 0
      %p130 = por %p128, %p129
      %p131 = scmp.ne.s32.totalorder %s120, %s123
      %p132 = scmp.eq.s32.totalorder %s21, 1
      %p133 = por %p131, %p132
      %p134 = scmp.ne.s32.totalorder %s123, %s124
      %p135 = scmp.eq.s32.totalorder %s21, 0
      %p136 = por %p134, %p135
      %p137 = scmp.ne.s32.totalorder %s123, %s124
      %p138 = scmp.eq.s32.totalorder %s22, 1
      %p139 = por %p137, %p138
      %p141 = scmp.ne.s32.totalorder %s124, %s140
      %p142 = scmp.eq.s32.totalorder %s22, 0
      %p143 = por %p141, %p142
      %p144 = scmp.le.s32.totalorder 1, %s16
      %p145 = scmp.lt.s32.totalorder %s16, 3
      %p146 = pnand %p144, %p145
      %p147 = pneg %p146
      // Predicated region
      $region9: #{tpu_custom_call.1} parent=5 // pred_check
        _
      $region10: #{tpu_custom_call.1} parent=5 // pred_check_branch
        %149 = sbr.rel (%p146) target = $region12
      $region11: #{tpu_custom_call.1} parent=5 // pred_region
        %s150 = ssub.s32 %s16, 1
        // Predicated region
        $region13: #{tpu_custom_call.1} parent=11 // pred_check
          %p151 = pneg %p89
        $region14: #{tpu_custom_call.1} parent=11 // pred_check_branch
          %153 = sbr.rel (%p151) target = $region16
        $region15: #{tpu_custom_call.1} parent=11 // pred_region
          _
        $region16: #{tpu_custom_call.1} parent=11 // pred_fallthru
          _
        // Predicated region
        $region17: #{tpu_custom_call.1} parent=11 // pred_check
          %p154 = pneg %p110
        $region18: #{tpu_custom_call.1} parent=11 // pred_check_branch
          %156 = sbr.rel (%p154) target = $region20
        $region19: #{tpu_custom_call.1} parent=11 // pred_region
          _
        $region20: #{tpu_custom_call.1} parent=11 // pred_fallthru
          _
      $region12: #{tpu_custom_call.1} parent=5 // pred_fallthru
        _
      %p157 = scmp.lt.s32.totalorder %s16, 2
      // Predicated region
      $region21: #{tpu_custom_call.1} parent=5 // pred_check
        %p158 = pneg %p157
      $region22: #{tpu_custom_call.1} parent=5 // pred_check_branch
        %160 = sbr.rel (%p158) target = $region24
      $region23: #{tpu_custom_call.1} parent=5 // pred_region
        // Predicated region
        $region25: #{tpu_custom_call.1} parent=23 // pred_check
          %p161 = pneg %p36
        $region26: #{tpu_custom_call.1} parent=23 // pred_check_branch
          %163 = sbr.rel (%p161) target = $region28
        $region27: #{tpu_custom_call.1} parent=23 // pred_region
          %s164 = sand.u32 %s26, 1
          %s165 = scalar_lea.sflag [#allocation3], %s164
          %s166 = sand.u32 %s26, 1
          %s167 = smul.addr %s166, 512
          %s168 = scalar_lea.vmem [#allocation2], %s167
          %s170 = ssub.s32 8192, 8192
          %171 = vsyncadd %s165, %s170
          %s172 = smul.addr %s16, 64
          %s173 = smul.addr %s172, 128
          %s174 = scalar_lea.hbm %s0, %s173
          %s175 = sshll.u32 %s168, 4
          %s176 = int_to_ptr.vmem [resolvable:$true] %s175
          %181 = dma.hbm_to_vmem [thread:$0]  %s174, 8192, %s176, %s165, 512, 512, 32
        $region28: #{tpu_custom_call.1} parent=23 // pred_fallthru
          _
        // Predicated region
        $region29: #{tpu_custom_call.1} parent=23 // pred_check
          %p182 = pneg %p62
        $region30: #{tpu_custom_call.1} parent=23 // pred_check_branch
          %184 = sbr.rel (%p182) target = $region32
        $region31: #{tpu_custom_call.1} parent=23 // pred_region
          %p185 = scmp.lt.s32.totalorder %s16, 1
          %s186 = scalar_select %p185, %s16, 1
          %s187 = smul.addr %s186, 8
          %s188 = smul.addr %s187, 8
          %s189 = scalar_lea.vmem %s1, %s188
        $region32: #{tpu_custom_call.1} parent=23 // pred_fallthru
          _
      $region24: #{tpu_custom_call.1} parent=5 // pred_fallthru
        _
      %p190 = scmp.le.s32.totalorder 1, %s16
      %p191 = scmp.lt.s32.totalorder %s16, 3
      %p192 = pnand %p190, %p191
      %p193 = pneg %p192
      // Predicated region
      $region33: #{tpu_custom_call.1} parent=5 // pred_check
        _
      $region34: #{tpu_custom_call.1} parent=5 // pred_check_branch
        %195 = sbr.rel (%p192) target = $region36
      $region35: #{tpu_custom_call.1} parent=5 // pred_region
        %s196 = ssub.s32 %s16, 1
        %s197 = sand.u32 %s29, 1
        %s198 = scalar_lea.sflag [#allocation3], %s197
        %s199 = sand.u32 %s29, 1
        %s200 = smul.addr %s199, 512
        %s201 = scalar_lea.vmem [#allocation2], %s200
        // Predicated region
        $region37: #{tpu_custom_call.1} parent=35 // pred_check
          %p202 = pneg %p42
        $region38: #{tpu_custom_call.1} parent=35 // pred_check_branch
          %204 = sbr.rel (%p202) target = $region40
        $region39: #{tpu_custom_call.1} parent=35 // pred_region
          %205 = dma.done %s198, 8192
        $region40: #{tpu_custom_call.1} parent=35 // pred_fallthru
          _
        %s206 = sand.u32 %s29, 1
        %s207 = scalar_lea.sflag [#allocation3], %s206
        %s208 = sand.u32 %s29, 1
        %s209 = smul.addr %s208, 512
        %s210 = scalar_lea.vmem [#allocation2], %s209
        %p211 = pneg %p42
        %p212 = pneg %p39
        %p213 = scmp.lt.s32.totalorder %s21, 1
        %s214 = scalar_select %p213, %s21, 1
        %s215 = smul.addr %s214, 8
        %s216 = smul.addr %s215, 8
        %s217 = scalar_lea.vmem %s1, %s216
        %p218 = pneg %p68
        %p219 = pneg %p65
        %p220 = pneg %p89
        %p221 = pneg %p86
        %p222 = pneg %p110
        %p223 = pneg %p107
        %p224 = pneg %p136
        %p225 = pneg %p133
        %s226 = sand.u32 %s123, 1
        %s227 = scalar_lea.sflag [#allocation4], %s226
        %s228 = sand.u32 %s123, 1
        %s229 = smul.addr %s228, 64
        %s230 = scalar_lea.vmem [#allocation5], %s229
        %p231 = scmp.lt.s32.totalorder %s21, 1
        %s232 = scalar_select %p231, %s21, 1
        %s233 = smul.addr %s232, 8
        %s234 = smul.addr %s233, 8
        %s235 = scalar_lea.vmem %s1, %s234
        %v236 = vld [vmem:[%s201] sm:$0xff]
        %v237 = vld [vmem:[%s201 + $0x8] sm:$0xff]
        %v238 = vld [vmem:[%s201 + $0x10] sm:$0xff]
        %v239 = vld [vmem:[%s201 + $0x18] sm:$0xff]
        %v240 = vld [vmem:[%s201 + $0x20] sm:$0xff]
        %v241 = vld [vmem:[%s201 + $0x28] sm:$0xff]
        %v242 = vld [vmem:[%s201 + $0x30] sm:$0xff]
        %v243 = vld [vmem:[%s201 + $0x38] sm:$0xff]
        %v244 = vld [vmem:[%s201 + $0x40] sm:$0xff]
        %v245 = vld [vmem:[%s201 + $0x48] sm:$0xff]
        %v246 = vld [vmem:[%s201 + $0x50] sm:$0xff]
        %v247 = vld [vmem:[%s201 + $0x58] sm:$0xff]
        %v248 = vld [vmem:[%s201 + $0x60] sm:$0xff]
        %v249 = vld [vmem:[%s201 + $0x68] sm:$0xff]
        %v250 = vld [vmem:[%s201 + $0x70] sm:$0xff]
        %v251 = vld [vmem:[%s201 + $0x78] sm:$0xff]
        %v252 = vld [vmem:[%s201 + $0x80] sm:$0xff]
        %v253 = vld [vmem:[%s201 + $0x88] sm:$0xff]
        %v254 = vld [vmem:[%s201 + $0x90] sm:$0xff]
        %v255 = vld [vmem:[%s201 + $0x98] sm:$0xff]
        %v256 = vld [vmem:[%s201 + $0xa0] sm:$0xff]
        %v257 = vld [vmem:[%s201 + $0xa8] sm:$0xff]
        %v258 = vld [vmem:[%s201 + $0xb0] sm:$0xff]
        %v259 = vld [vmem:[%s201 + $0xb8] sm:$0xff]
        %v260 = vld [vmem:[%s201 + $0xc0] sm:$0xff]
        %v261 = vld [vmem:[%s201 + $0xc8] sm:$0xff]
        %v262 = vld [vmem:[%s201 + $0xd0] sm:$0xff]
        %v263 = vld [vmem:[%s201 + $0xd8] sm:$0xff]
        %v264 = vld [vmem:[%s201 + $0xe0] sm:$0xff]
        %v265 = vld [vmem:[%s201 + $0xe8] sm:$0xff]
        %v266 = vld [vmem:[%s201 + $0xf0] sm:$0xff]
        %v267 = vld [vmem:[%s201 + $0xf8] sm:$0xff]
        %v268 = vld [vmem:[%s201 + $0x100] sm:$0xff]
        %v269 = vld [vmem:[%s201 + $0x108] sm:$0xff]
        %v270 = vld [vmem:[%s201 + $0x110] sm:$0xff]
        %v271 = vld [vmem:[%s201 + $0x118] sm:$0xff]
        %v272 = vld [vmem:[%s201 + $0x120] sm:$0xff]
        %v273 = vld [vmem:[%s201 + $0x128] sm:$0xff]
        %v274 = vld [vmem:[%s201 + $0x130] sm:$0xff]
        %v275 = vld [vmem:[%s201 + $0x138] sm:$0xff]
        %v276 = vld [vmem:[%s201 + $0x140] sm:$0xff]
        %v277 = vld [vmem:[%s201 + $0x148] sm:$0xff]
        %v278 = vld [vmem:[%s201 + $0x150] sm:$0xff]
        %v279 = vld [vmem:[%s201 + $0x158] sm:$0xff]
        %v280 = vld [vmem:[%s201 + $0x160] sm:$0xff]
        %v281 = vld [vmem:[%s201 + $0x168] sm:$0xff]
        %v282 = vld [vmem:[%s201 + $0x170] sm:$0xff]
        %v283 = vld [vmem:[%s201 + $0x178] sm:$0xff]
        %v284 = vld [vmem:[%s201 + $0x180] sm:$0xff]
        %v285 = vld [vmem:[%s201 + $0x188] sm:$0xff]
        %v286 = vld [vmem:[%s201 + $0x190] sm:$0xff]
        %v287 = vld [vmem:[%s201 + $0x198] sm:$0xff]
        %v288 = vld [vmem:[%s201 + $0x1a0] sm:$0xff]
        %v289 = vld [vmem:[%s201 + $0x1a8] sm:$0xff]
        %v290 = vld [vmem:[%s201 + $0x1b0] sm:$0xff]
        %v291 = vld [vmem:[%s201 + $0x1b8] sm:$0xff]
        %v292 = vld [vmem:[%s201 + $0x1c0] sm:$0xff]
        %v293 = vld [vmem:[%s201 + $0x1c8] sm:$0xff]
        %v294 = vld [vmem:[%s201 + $0x1d0] sm:$0xff]
        %v295 = vld [vmem:[%s201 + $0x1d8] sm:$0xff]
        %v296 = vld [vmem:[%s201 + $0x1e0] sm:$0xff]
        %v297 = vld [vmem:[%s201 + $0x1e8] sm:$0xff]
        %v298 = vld [vmem:[%s201 + $0x1f0] sm:$0xff]
        %v299 = vld [vmem:[%s201 + $0x1f8] sm:$0xff]
        %v300 = vadd.f32 %v236, %v240
        %v301 = vadd.f32 %v237, %v241
        %v302 = vadd.f32 %v238, %v242
        %v303 = vadd.f32 %v239, %v243
        %v304 = vadd.f32 %v244, %v248
        %v305 = vadd.f32 %v245, %v249
        %v306 = vadd.f32 %v246, %v250
        %v307 = vadd.f32 %v247, %v251
        %v308 = vadd.f32 %v252, %v256
        %v309 = vadd.f32 %v253, %v257
        %v310 = vadd.f32 %v254, %v258
        %v311 = vadd.f32 %v255, %v259
        %v312 = vadd.f32 %v260, %v264
        %v313 = vadd.f32 %v261, %v265
        %v314 = vadd.f32 %v262, %v266
        %v315 = vadd.f32 %v263, %v267
        %v316 = vadd.f32 %v268, %v272
        %v317 = vadd.f32 %v269, %v273
        %v318 = vadd.f32 %v270, %v274
        %v319 = vadd.f32 %v271, %v275
        %v320 = vadd.f32 %v276, %v280
        %v321 = vadd.f32 %v277, %v281
        %v322 = vadd.f32 %v278, %v282
        %v323 = vadd.f32 %v279, %v283
        %v324 = vadd.f32 %v284, %v288
        %v325 = vadd.f32 %v285, %v289
        %v326 = vadd.f32 %v286, %v290
        %v327 = vadd.f32 %v287, %v291
        %v328 = vadd.f32 %v292, %v296
        %v329 = vadd.f32 %v293, %v297
        %v330 = vadd.f32 %v294, %v298
        %v331 = vadd.f32 %v295, %v299
        %v332 = vld [vmem:[%s2] sm:$0xff]
        %v333 = vld [vmem:[%s2 + $0x8] sm:$0xff]
        %v334 = vld [vmem:[%s2 + $0x10] sm:$0xff]
        %v335 = vld [vmem:[%s2 + $0x18] sm:$0xff]
        %v336 = vld [vmem:[%s2 + $0x20] sm:$0xff]
        %v337 = vld [vmem:[%s2 + $0x28] sm:$0xff]
        %v338 = vld [vmem:[%s2 + $0x30] sm:$0xff]
        %v339 = vld [vmem:[%s2 + $0x38] sm:$0xff]
        %v340 = vld [vmem:[%s2 + $0x40] sm:$0xff]
        %v341 = vld [vmem:[%s2 + $0x48] sm:$0xff]
        %v342 = vld [vmem:[%s2 + $0x50] sm:$0xff]
        %v343 = vld [vmem:[%s2 + $0x58] sm:$0xff]
        %v344 = vld [vmem:[%s2 + $0x60] sm:$0xff]
        %v345 = vld [vmem:[%s2 + $0x68] sm:$0xff]
        %v346 = vld [vmem:[%s2 + $0x70] sm:$0xff]
        %v347 = vld [vmem:[%s2 + $0x78] sm:$0xff]
        %v348 = vld [vmem:[%s2 + $0x80] sm:$0xff]
        %v349 = vld [vmem:[%s2 + $0x88] sm:$0xff]
        %v350 = vld [vmem:[%s2 + $0x90] sm:$0xff]
        %v351 = vld [vmem:[%s2 + $0x98] sm:$0xff]
        %v352 = vld [vmem:[%s2 + $0xa0] sm:$0xff]
        %v353 = vld [vmem:[%s2 + $0xa8] sm:$0xff]
        %v354 = vld [vmem:[%s2 + $0xb0] sm:$0xff]
        %v355 = vld [vmem:[%s2 + $0xb8] sm:$0xff]
        %v356 = vld [vmem:[%s2 + $0xc0] sm:$0xff]
        %v357 = vld [vmem:[%s2 + $0xc8] sm:$0xff]
        %v358 = vld [vmem:[%s2 + $0xd0] sm:$0xff]
        %v359 = vld [vmem:[%s2 + $0xd8] sm:$0xff]
        %v360 = vld [vmem:[%s2 + $0xe0] sm:$0xff]
        %v361 = vld [vmem:[%s2 + $0xe8] sm:$0xff]
        %v362 = vld [vmem:[%s2 + $0xf0] sm:$0xff]
        %v363 = vld [vmem:[%s2 + $0xf8] sm:$0xff]
        %v364 = vld [vmem:[%s2 + $0x100] sm:$0xff]
        %v365 = vld [vmem:[%s2 + $0x108] sm:$0xff]
        %v366 = vld [vmem:[%s2 + $0x110] sm:$0xff]
        %v367 = vld [vmem:[%s2 + $0x118] sm:$0xff]
        %v368 = vld [vmem:[%s2 + $0x120] sm:$0xff]
        %v369 = vld [vmem:[%s2 + $0x128] sm:$0xff]
        %v370 = vld [vmem:[%s2 + $0x130] sm:$0xff]
        %v371 = vld [vmem:[%s2 + $0x138] sm:$0xff]
        %v372 = vld [vmem:[%s2 + $0x140] sm:$0xff]
        %v373 = vld [vmem:[%s2 + $0x148] sm:$0xff]
        %v374 = vld [vmem:[%s2 + $0x150] sm:$0xff]
        %v375 = vld [vmem:[%s2 + $0x158] sm:$0xff]
        %v376 = vld [vmem:[%s2 + $0x160] sm:$0xff]
        %v377 = vld [vmem:[%s2 + $0x168] sm:$0xff]
        %v378 = vld [vmem:[%s2 + $0x170] sm:$0xff]
        %v379 = vld [vmem:[%s2 + $0x178] sm:$0xff]
        %v380 = vld [vmem:[%s2 + $0x180] sm:$0xff]
        %v381 = vld [vmem:[%s2 + $0x188] sm:$0xff]
        %v382 = vld [vmem:[%s2 + $0x190] sm:$0xff]
        %v383 = vld [vmem:[%s2 + $0x198] sm:$0xff]
        %v384 = vld [vmem:[%s2 + $0x1a0] sm:$0xff]
        %v385 = vld [vmem:[%s2 + $0x1a8] sm:$0xff]
        %v386 = vld [vmem:[%s2 + $0x1b0] sm:$0xff]
        %v387 = vld [vmem:[%s2 + $0x1b8] sm:$0xff]
        %v388 = vld [vmem:[%s2 + $0x1c0] sm:$0xff]
        %v389 = vld [vmem:[%s2 + $0x1c8] sm:$0xff]
        %v390 = vld [vmem:[%s2 + $0x1d0] sm:$0xff]
        %v391 = vld [vmem:[%s2 + $0x1d8] sm:$0xff]
        %v392 = vld [vmem:[%s2 + $0x1e0] sm:$0xff]
        %v393 = vld [vmem:[%s2 + $0x1e8] sm:$0xff]
        %v394 = vld [vmem:[%s2 + $0x1f0] sm:$0xff]
        %v395 = vld [vmem:[%s2 + $0x1f8] sm:$0xff]
        %v396 = vld [vmem:[%s3] sm:$0x1]
        %v398 = vlaneseq
        %v399 = vshrl.u32 %v398, 7
        %v400 = vsub.s32 0, %v399
        %v401 = vrot.slane %v396, %v400
        %403 = vmatprep.subr.mxu0 0.0
        %404 = vmatpush1.msra.mxu0 %v347
        %405 = vmatprep.subr.mxu0 0.0
        %406 = vmatpush1.msra.mxu0 %v346
        %407 = vmatprep.subr.mxu0 0.0
        %408 = vmatpush1.msra.mxu0 %v345
        %409 = vmatprep.subr.mxu0 0.0
        %410 = vmatpush1.msra.mxu0 %v344
        %411 = vmatprep.subr.mxu0 0.0
        %412 = vmatpush1.msra.mxu0 %v343
        %413 = vmatprep.subr.mxu0 0.0
        %414 = vmatpush1.msra.mxu0 %v342
        %415 = vmatprep.subr.mxu0 0.0
        %416 = vmatpush1.msra.mxu0 %v341
        %417 = vmatprep.subr.mxu0 0.0
        %418 = vmatpush1.msra.mxu0 %v340
        %419 = vmatprep.subr.mxu0 0.0
        %420 = vmatpush1.msra.mxu0 %v339
        %421 = vmatprep.subr.mxu0 0.0
        %422 = vmatpush1.msra.mxu0 %v338
        %423 = vmatprep.subr.mxu0 0.0
        %424 = vmatpush1.msra.mxu0 %v337
        %425 = vmatprep.subr.mxu0 0.0
        %426 = vmatpush1.msra.mxu0 %v336
        %427 = vmatprep.subr.mxu0 0.0
        %428 = vmatpush1.msra.mxu0 %v335
        %429 = vmatprep.subr.mxu0 0.0
        %430 = vmatpush1.msra.mxu0 %v334
        %431 = vmatprep.subr.mxu0 0.0
        %432 = vmatpush1.msra.mxu0 %v333
        %433 = vmatprep.subr.mxu0 0.0
        %434 = vmatpush1.msra.mxu0 %v332
        %435 = vmatprep.subr.mxu0 0.0
        %436 = vmatpush2.msra.mxu0 %v363
        %437 = vmatprep.subr.mxu0 0.0
        %438 = vmatpush2.msra.mxu0 %v362
        %439 = vmatprep.subr.mxu0 0.0
        %440 = vmatpush2.msra.mxu0 %v361
        %441 = vmatprep.subr.mxu0 0.0
        %442 = vmatpush2.msra.mxu0 %v360
        %443 = vmatprep.subr.mxu0 0.0
        %444 = vmatpush2.msra.mxu0 %v359
        %445 = vmatprep.subr.mxu0 0.0
        %446 = vmatpush2.msra.mxu0 %v358
        %447 = vmatprep.subr.mxu0 0.0
        %448 = vmatpush2.msra.mxu0 %v357
        %449 = vmatprep.subr.mxu0 0.0
        %450 = vmatpush2.msra.mxu0 %v356
        %451 = vmatprep.subr.mxu0 0.0
        %452 = vmatpush2.msra.mxu0 %v355
        %453 = vmatprep.subr.mxu0 0.0
        %454 = vmatpush2.msra.mxu0 %v354
        %455 = vmatprep.subr.mxu0 0.0
        %456 = vmatpush2.msra.mxu0 %v353
        %457 = vmatprep.subr.mxu0 0.0
        %458 = vmatpush2.msra.mxu0 %v352
        %459 = vmatprep.subr.mxu0 0.0
        %460 = vmatpush2.msra.mxu0 %v351
        %461 = vmatprep.subr.mxu0 0.0
        %462 = vmatpush2.msra.mxu0 %v350
        %463 = vmatprep.subr.mxu0 0.0
        %464 = vmatpush2.msra.mxu0 %v349
        %465 = vmatprep.subr.mxu0 0.0
        %466 = vmatpush2.msra.mxu0 %v348
        %467 = vmatprep.mubr.f32.mxu0 %v301
        %468 = vmatmul.mubr.f32.gmra.mxu0 %v300
        %v469 = vpop.f32.mrf.mxu0
        %v470 = vadd.f32 %v401, %v469
        %v471 = vpop.f32.mrf.mxu0
        %472 = vmatprep.mubr.f32.mxu0 %v305
        %473 = vmatmul.mubr.f32.gmra.mxu0 %v304
        %v474 = vpop.f32.mrf.mxu0
        %v475 = vadd.f32 %v401, %v474
        %v476 = vpop.f32.mrf.mxu0
        %477 = vmatprep.mubr.f32.mxu0 %v309
        %478 = vmatmul.mubr.f32.gmra.mxu0 %v308
        %v479 = vpop.f32.mrf.mxu0
        %v480 = vadd.f32 %v401, %v479
        %v481 = vpop.f32.mrf.mxu0
        %482 = vmatprep.mubr.f32.mxu0 %v313
        %483 = vmatmul.mubr.f32.gmra.mxu0 %v312
        %v484 = vpop.f32.mrf.mxu0
        %v485 = vadd.f32 %v401, %v484
        %v486 = vpop.f32.mrf.mxu0
        %487 = vmatprep.mubr.f32.mxu0 %v317
        %488 = vmatmul.mubr.f32.gmra.mxu0 %v316
        %v489 = vpop.f32.mrf.mxu0
        %v490 = vadd.f32 %v401, %v489
        %v491 = vpop.f32.mrf.mxu0
        %492 = vmatprep.mubr.f32.mxu0 %v321
        %493 = vmatmul.mubr.f32.gmra.mxu0 %v320
        %v494 = vpop.f32.mrf.mxu0
        %v495 = vadd.f32 %v401, %v494
        %v496 = vpop.f32.mrf.mxu0
        %497 = vmatprep.mubr.f32.mxu0 %v325
        %498 = vmatmul.mubr.f32.gmra.mxu0 %v324
        %v499 = vpop.f32.mrf.mxu0
        %v500 = vadd.f32 %v401, %v499
        %v501 = vpop.f32.mrf.mxu0
        %502 = vmatprep.mubr.f32.mxu0 %v329
        %503 = vmatmul.mubr.f32.gmra.mxu0 %v328
        %v504 = vpop.f32.mrf.mxu0
        %v505 = vadd.f32 %v401, %v504
        %v506 = vpop.f32.mrf.mxu0
        %507 = vdwg.mxu0
        %508 = vmatprep.subr.mxu0 0.0
        %509 = vmatpush1.msra.mxu0 %v379
        %510 = vmatprep.subr.mxu0 0.0
        %511 = vmatpush1.msra.mxu0 %v378
        %512 = vmatprep.subr.mxu0 0.0
        %513 = vmatpush1.msra.mxu0 %v377
        %514 = vmatprep.subr.mxu0 0.0
        %515 = vmatpush1.msra.mxu0 %v376
        %516 = vmatprep.subr.mxu0 0.0
        %517 = vmatpush1.msra.mxu0 %v375
        %518 = vmatprep.subr.mxu0 0.0
        %519 = vmatpush1.msra.mxu0 %v374
        %520 = vmatprep.subr.mxu0 0.0
        %521 = vmatpush1.msra.mxu0 %v373
        %522 = vmatprep.subr.mxu0 0.0
        %523 = vmatpush1.msra.mxu0 %v372
        %524 = vmatprep.subr.mxu0 0.0
        %525 = vmatpush1.msra.mxu0 %v371
        %526 = vmatprep.subr.mxu0 0.0
        %527 = vmatpush1.msra.mxu0 %v370
        %528 = vmatprep.subr.mxu0 0.0
        %529 = vmatpush1.msra.mxu0 %v369
        %530 = vmatprep.subr.mxu0 0.0
        %531 = vmatpush1.msra.mxu0 %v368
        %532 = vmatprep.subr.mxu0 0.0
        %533 = vmatpush1.msra.mxu0 %v367
        %534 = vmatprep.subr.mxu0 0.0
        %535 = vmatpush1.msra.mxu0 %v366
        %536 = vmatprep.subr.mxu0 0.0
        %537 = vmatpush1.msra.mxu0 %v365
        %538 = vmatprep.subr.mxu0 0.0
        %539 = vmatpush1.msra.mxu0 %v364
        %540 = vmatprep.subr.mxu0 0.0
        %541 = vmatpush2.msra.mxu0 %v395
        %542 = vmatprep.subr.mxu0 0.0
        %543 = vmatpush2.msra.mxu0 %v394
        %544 = vmatprep.subr.mxu0 0.0
        %545 = vmatpush2.msra.mxu0 %v393
        %546 = vmatprep.subr.mxu0 0.0
        %547 = vmatpush2.msra.mxu0 %v392
        %548 = vmatprep.subr.mxu0 0.0
        %549 = vmatpush2.msra.mxu0 %v391
        %550 = vmatprep.subr.mxu0 0.0
        %551 = vmatpush2.msra.mxu0 %v390
        %552 = vmatprep.subr.mxu0 0.0
        %553 = vmatpush2.msra.mxu0 %v389
        %554 = vmatprep.subr.mxu0 0.0
        %555 = vmatpush2.msra.mxu0 %v388
        %556 = vmatprep.subr.mxu0 0.0
        %557 = vmatpush2.msra.mxu0 %v387
        %558 = vmatprep.subr.mxu0 0.0
        %559 = vmatpush2.msra.mxu0 %v386
        %560 = vmatprep.subr.mxu0 0.0
        %561 = vmatpush2.msra.mxu0 %v385
        %562 = vmatprep.subr.mxu0 0.0
        %563 = vmatpush2.msra.mxu0 %v384
        %564 = vmatprep.subr.mxu0 0.0
        %565 = vmatpush2.msra.mxu0 %v383
        %566 = vmatprep.subr.mxu0 0.0
        %567 = vmatpush2.msra.mxu0 %v382
        %568 = vmatprep.subr.mxu0 0.0
        %569 = vmatpush2.msra.mxu0 %v381
        %570 = vmatprep.subr.mxu0 0.0
        %571 = vmatpush2.msra.mxu0 %v380
        %572 = vmatprep.mubr.f32.mxu0 %v303
        %573 = vmatmul.mubr.f32.gmra.mxu0 %v302
        %v574 = vpop.f32.mrf.mxu0
        %v575 = vadd.f32 %v470, %v574
        %v576 = vpop.f32.mrf.mxu0
        %577 = vmatprep.mubr.f32.mxu0 %v307
        %578 = vmatmul.mubr.f32.gmra.mxu0 %v306
        %v579 = vpop.f32.mrf.mxu0
        %v580 = vadd.f32 %v475, %v579
        %v581 = vpop.f32.mrf.mxu0
        %582 = vmatprep.mubr.f32.mxu0 %v311
        %583 = vmatmul.mubr.f32.gmra.mxu0 %v310
        %v584 = vpop.f32.mrf.mxu0
        %v585 = vadd.f32 %v480, %v584
        %v586 = vpop.f32.mrf.mxu0
        %587 = vmatprep.mubr.f32.mxu0 %v315
        %588 = vmatmul.mubr.f32.gmra.mxu0 %v314
        %v589 = vpop.f32.mrf.mxu0
        %v590 = vadd.f32 %v485, %v589
        %v591 = vpop.f32.mrf.mxu0
        %592 = vmatprep.mubr.f32.mxu0 %v319
        %593 = vmatmul.mubr.f32.gmra.mxu0 %v318
        %v594 = vpop.f32.mrf.mxu0
        %v595 = vadd.f32 %v490, %v594
        %v596 = vpop.f32.mrf.mxu0
        %597 = vmatprep.mubr.f32.mxu0 %v323
        %598 = vmatmul.mubr.f32.gmra.mxu0 %v322
        %v599 = vpop.f32.mrf.mxu0
        %v600 = vadd.f32 %v495, %v599
        %v601 = vpop.f32.mrf.mxu0
        %602 = vmatprep.mubr.f32.mxu0 %v327
        %603 = vmatmul.mubr.f32.gmra.mxu0 %v326
        %v604 = vpop.f32.mrf.mxu0
        %v605 = vadd.f32 %v500, %v604
        %v606 = vpop.f32.mrf.mxu0
        %607 = vmatprep.mubr.f32.mxu0 %v331
        %608 = vmatmul.mubr.f32.gmra.mxu0 %v330
        %v609 = vpop.f32.mrf.mxu0
        %v610 = vadd.f32 %v505, %v609
        %v611 = vpop.f32.mrf.mxu0
        %612 = vdwg.mxu0
        %v613 = vld [vmem:[%s235] sm:$0xff]
        %v614 = vld [vmem:[%s235 + $0x8] sm:$0xff]
        %v615 = vld [vmem:[%s235 + $0x10] sm:$0xff]
        %v616 = vld [vmem:[%s235 + $0x18] sm:$0xff]
        %v617 = vld [vmem:[%s235 + $0x20] sm:$0xff]
        %v618 = vld [vmem:[%s235 + $0x28] sm:$0xff]
        %v619 = vld [vmem:[%s235 + $0x30] sm:$0xff]
        %v620 = vld [vmem:[%s235 + $0x38] sm:$0xff]
        %629 = vrot.lane.b32.xlu0 %v613, 64
        %v630 = vpop.permute.xlu0 %629
        %631 = vrot.lane.b32.xlu0 %v614, 64
        %v632 = vpop.permute.xlu0 %631
        %633 = vrot.lane.b32.xlu0 %v615, 64
        %v634 = vpop.permute.xlu0 %633
        %635 = vrot.lane.b32.xlu0 %v616, 64
        %v636 = vpop.permute.xlu0 %635
        %637 = vrot.lane.b32.xlu0 %v617, 64
        %v638 = vpop.permute.xlu0 %637
        %639 = vrot.lane.b32.xlu0 %v618, 64
        %v640 = vpop.permute.xlu0 %639
        %641 = vrot.lane.b32.xlu0 %v619, 64
        %v642 = vpop.permute.xlu0 %641
        %643 = vrot.lane.b32.xlu0 %v620, 64
        %v644 = vpop.permute.xlu0 %643
        %vm653 = vcmask 523264
        %v654 = vsel %vm653, %v575, %v630
        %v655 = vsel %vm653, %v580, %v632
        %v656 = vsel %vm653, %v585, %v634
        %v657 = vsel %vm653, %v590, %v636
        %v658 = vsel %vm653, %v595, %v638
        %v659 = vsel %vm653, %v600, %v640
        %v660 = vsel %vm653, %v605, %v642
        %v661 = vsel %vm653, %v610, %v644
        %662 = vst [vmem:[%s230] sm:$0xff] %v654
        %663 = vst [vmem:[%s230 + $0x8] sm:$0xff] %v655
        %664 = vst [vmem:[%s230 + $0x10] sm:$0xff] %v656
        %665 = vst [vmem:[%s230 + $0x18] sm:$0xff] %v657
        %666 = vst [vmem:[%s230 + $0x20] sm:$0xff] %v658
        %667 = vst [vmem:[%s230 + $0x28] sm:$0xff] %v659
        %668 = vst [vmem:[%s230 + $0x30] sm:$0xff] %v660
        %669 = vst [vmem:[%s230 + $0x38] sm:$0xff] %v661
        %s670 = sand.u32 %s123, 1
        %s671 = scalar_lea.sflag [#allocation4], %s670
        %s672 = sand.u32 %s123, 1
        %s673 = smul.addr %s672, 64
        %s674 = scalar_lea.vmem [#allocation5], %s673
        // Predicated region
        $region41: #{tpu_custom_call.1} parent=35 // pred_check
          %p675 = pneg %p133
        $region42: #{tpu_custom_call.1} parent=35 // pred_check_branch
          %677 = sbr.rel (%p675) target = $region44
        $region43: #{tpu_custom_call.1} parent=35 // pred_region
          %s679 = ssub.s32 1024, 1024
          %680 = vsyncadd %s671, %s679
          %s681 = smul.addr %s21, 8
          %s682 = smul.addr %s681, 128
          %s683 = scalar_lea.hbm %s4, %s682
          %s684 = sshll.u32 %s674, 4
          %s685 = int_to_ptr.vmem [resolvable:$true] %s684
          %690 = dma.vmem_to_hbm [thread:$0]  %s685, 1024, %s683, %s671, 128, 128, 8
        $region44: #{tpu_custom_call.1} parent=35 // pred_fallthru
          _
      $region36: #{tpu_custom_call.1} parent=5 // pred_fallthru
        _
      %p691 = scmp.le.s32.totalorder 2, %s16
      // Predicated region
      $region45: #{tpu_custom_call.1} parent=5 // pred_check
        %p692 = pneg %p691
      $region46: #{tpu_custom_call.1} parent=5 // pred_check_branch
        %694 = sbr.rel (%p692) target = $region48
      $region47: #{tpu_custom_call.1} parent=5 // pred_region
        %s695 = ssub.s32 %s16, 2
        // Predicated region
        $region49: #{tpu_custom_call.1} parent=47 // pred_check
          %p696 = pneg %p139
        $region50: #{tpu_custom_call.1} parent=47 // pred_check_branch
          %698 = sbr.rel (%p696) target = $region52
        $region51: #{tpu_custom_call.1} parent=47 // pred_region
          %s699 = sand.u32 %s124, 1
          %s700 = scalar_lea.sflag [#allocation4], %s699
          %s701 = sand.u32 %s124, 1
          %s702 = smul.addr %s701, 64
          %s703 = scalar_lea.vmem [#allocation5], %s702
          %704 = dma.done %s700, 1024
        $region52: #{tpu_custom_call.1} parent=47 // pred_fallthru
          _
      $region48: #{tpu_custom_call.1} parent=5 // pred_fallthru
        _
    $region6: #{tpu_custom_call.1} parent=1 // loop_footer
      %s20 = sadd.s32 1, %s16
    $region7: #{tpu_custom_call.1} parent=1 // loop_footer_branch
      %15 = sbr.rel target = $region3
    $region8: #{tpu_custom_call.1} parent=1 // loop_exit
      _
    %705 = vsyncpa [#allocation3], 1
    %s706 = scalar_lea.sflag [#allocation3], 1
    %707 = vsyncpa %s706, 1
    %708 = vsyncpa [#allocation4], 1
    %s709 = scalar_lea.sflag [#allocation4], 1
    %710 = vsyncpa %s709, 1

</llo_original>
